<compile_context>
chip_gen: v6e
topology: v6e:2x2x1
jax: 0.10.0
libtpu: 0.0.40
codegen_flags: <defaults>
</compile_context>

<pallas_src>
import functools

import jax
import jax.numpy as jnp
from jax.experimental import pallas as pl
from jax.experimental.pallas import tpu as pltpu


def _actor_kernel(x_ref, w1_ref, w2_ref, w3_ref, b_ref, out_ref, *,
                  min_action, max_action, h1_dim, h2_dim):
    # x tile arrives f32; cast to bf16 so both MXU operands are bf16.
    x = x_ref[...].astype(jnp.bfloat16)

    # Layer 1: Linear(state_num, 256) + ReLU   (f32 accumulation)
    h1 = jnp.dot(x, w1_ref[...], preferred_element_type=jnp.float32)
    h1 = jnp.maximum(h1 + b_ref[:, :h1_dim], 0.0)

    # Layer 2: Linear(256, 512) + ReLU
    h2 = jnp.dot(h1.astype(jnp.bfloat16), w2_ref[...],
                 preferred_element_type=jnp.float32)
    h2 = jnp.maximum(h2 + b_ref[:, h1_dim:h1_dim + h2_dim], 0.0)

    # Output layer: Linear(512, action_num[padded to 128 lanes]) + clamp
    a = jnp.dot(h2.astype(jnp.bfloat16), w3_ref[...],
                preferred_element_type=jnp.float32)
    a = a + b_ref[:, h1_dim + h2_dim:]
    out_ref[...] = jnp.clip(a, min_action, max_action).astype(out_ref.dtype)


def init_actor_params(key, state_num, action_num):
    """Deterministic PyTorch-style (uniform +/- 1/sqrt(fan_in)) init, f32."""
    def linear_init(k, fan_in, fan_out):
        kw, kb = jax.random.split(k)
        bound = 1.0 / jnp.sqrt(fan_in)
        w = jax.random.uniform(kw, (fan_in, fan_out), jnp.float32, -bound, bound)
        b = jax.random.uniform(kb, (1, fan_out), jnp.float32, -bound, bound)
        return w, b

    k1, k2, k3 = jax.random.split(key, 3)
    w1, b1 = linear_init(k1, state_num, 256)
    w2, b2 = linear_init(k2, 256, 512)
    w3, b3 = linear_init(k3, 512, action_num)
    return (w1, b1, w2, b2, w3, b3)


def pack_actor_params(params):
    """One-time prep: bf16 weights, lane-padded output layer, packed biases."""
    w1, b1, w2, b2, w3, b3 = params
    action_num = w3.shape[1]
    a_pad = pl.cdiv(action_num, 128) * 128
    w3p = jnp.pad(w3, ((0, 0), (0, a_pad - action_num)))
    b3p = jnp.pad(b3, ((0, 0), (0, a_pad - action_num)))
    packed_bias = jnp.concatenate([b1, b2, b3p], axis=1).astype(jnp.float32)
    return (w1.astype(jnp.bfloat16),
            w2.astype(jnp.bfloat16),
            w3p.astype(jnp.bfloat16),
            packed_bias,
            action_num)


def actor_net_forward(x, packed, min_action, max_action):
    """ActorNet forward pass with a single Pallas kernel, gridded over batch."""
    w1, w2, w3, bias, action_num = packed
    batch, state_num = x.shape
    h1_dim = w1.shape[1]
    h2_dim = w2.shape[1]
    a_pad = w3.shape[1]

    # Batch tiling: up to 512-row tiles (amortize per-step overhead, keep
    # intermediates ~1 MiB), minimum one (8, .) sublane tile.
    bb = min(pl.cdiv(batch, 8) * 8, 512)
    b_pad = pl.cdiv(batch, bb) * bb
    if b_pad != batch:
        x = jnp.pad(x, ((0, b_pad - batch), (0, 0)))
    grid_n = b_pad // bb

    kernel = functools.partial(
        _actor_kernel,
        min_action=float(min_action),
        max_action=float(max_action),
        h1_dim=h1_dim,
        h2_dim=h2_dim,
    )

    flops = 2 * b_pad * (state_num * h1_dim + h1_dim * h2_dim + h2_dim * a_pad)
    bytes_accessed = (
        b_pad * state_num * 4                # x (f32)
        + (w1.size + w2.size + w3.size) * 2  # bf16 weights
        + bias.size * 4                      # packed biases (f32)
        + b_pad * a_pad * 4                  # output (f32)
    )

    out = pl.pallas_call(
        kernel,
        out_shape=jax.ShapeDtypeStruct((b_pad, a_pad), jnp.float32),
        grid=(grid_n,),
        in_specs=[
            pl.BlockSpec((bb, state_num), lambda i: (i, 0)),  # x: per-step tile
            pl.BlockSpec(w1.shape, lambda i: (0, 0)),          # weights stay
            pl.BlockSpec(w2.shape, lambda i: (0, 0)),          # resident in
            pl.BlockSpec(w3.shape, lambda i: (0, 0)),          # VMEM across grid
            pl.BlockSpec(bias.shape, lambda i: (0, 0)),        # packed biases
        ],
        out_specs=pl.BlockSpec((bb, a_pad), lambda i: (i, 0)),
        compiler_params=pltpu.CompilerParams(
            dimension_semantics=("parallel",)),
        cost_estimate=pl.CostEstimate(
            flops=flops, transcendentals=0, bytes_accessed=bytes_accessed),
    )(x, w1, w2, w3, bias)

    return out[:batch, :action_num]


def actor_net_reference(x, params, min_action, max_action):
    """Pure-JAX f32 reference (module semantics)."""
    w1, b1, w2, b2, w3, b3 = params
    dot = functools.partial(jnp.dot, precision=jax.lax.Precision.HIGHEST)
    h1 = jnp.maximum(dot(x, w1) + b1, 0.0)
    h2 = jnp.maximum(dot(h1, w2) + b2, 0.0)
    return jnp.clip(dot(h2, w3) + b3, min_action, max_action)


def actor_net_reference_bf16(x, params, min_action, max_action):
    """Pure-JAX reference matching the kernel numerics (bf16 in, f32 acc)."""
    w1, b1, w2, b2, w3, b3 = params
    bf = jnp.bfloat16
    h1 = jnp.dot(x.astype(bf), w1.astype(bf),
                 preferred_element_type=jnp.float32) + b1
    h1 = jnp.maximum(h1, 0.0)
    h2 = jnp.dot(h1.astype(bf), w2.astype(bf),
                 preferred_element_type=jnp.float32) + b2
    h2 = jnp.maximum(h2, 0.0)
    a = jnp.dot(h2.astype(bf), w3.astype(bf),
                preferred_element_type=jnp.float32) + b3
    return jnp.clip(a, min_action, max_action)


if __name__ == "__main__":
    state_num = 16
    action_num = 8
    batch = 8
    min_action = -1.0
    max_action = 1.0

    key = jax.random.PRNGKey(0)
    k_params, k_x = jax.random.split(key)

    params = init_actor_params(k_params, state_num, action_num)
    packed = pack_actor_params(params)
    x = jax.random.normal(k_x, (batch, state_num), jnp.float32)

    out = actor_net_forward(x, packed, min_action, max_action)
    out = jax.block_until_ready(out)
    assert out.shape == (batch, action_num)

    # Tight check against a reference that reproduces the kernel's numerics.
    ref_match = actor_net_reference_bf16(x, params, min_action, max_action)
    assert jnp.allclose(out, ref_match, atol=1e-3, rtol=1e-3), \
        "mismatch vs bf16-matched reference"

    # Looser check against the full-f32 module semantics (bf16 weight error).
    ref_f32 = actor_net_reference(x, params, min_action, max_action)
    assert jnp.allclose(out, ref_f32, atol=5e-2, rtol=5e-2), \
        "mismatch vs f32 reference"

    print("KERNEL_OK")
</pallas_src>

<mosaic_0001>
module attributes {stable_mosaic.version = 11 : i64} {
  func.func @_actor_kernel(%arg0: i32, %arg1: memref<8x16xf32, #tpu.memory_space<vmem>>, %arg2: memref<16x256xbf16, #tpu.memory_space<vmem>>, %arg3: memref<256x512xbf16, #tpu.memory_space<vmem>>, %arg4: memref<512x128xbf16, #tpu.memory_space<vmem>>, %arg5: memref<1x896xf32, #tpu.memory_space<vmem>>, %arg6: memref<8x128xf32, #tpu.memory_space<vmem>>) attributes {dimension_semantics = [#tpu.dimension_semantics<parallel>], iteration_bounds = array<i64: 1>, scalar_prefetch = 0 : i64, scratch_operands = 0 : i64, tpu.core_type = #tpu.core_type<tc>, window_params = [{transform_indices = @transform_0, window_bounds = array<i64: 8, 16>}, {pipeline_mode = #tpu.pipeline_mode<synchronous>, transform_indices = @transform_1, window_bounds = array<i64: 16, 256>}, {pipeline_mode = #tpu.pipeline_mode<synchronous>, transform_indices = @transform_2, window_bounds = array<i64: 256, 512>}, {pipeline_mode = #tpu.pipeline_mode<synchronous>, transform_indices = @transform_3, window_bounds = array<i64: 512, 128>}, {pipeline_mode = #tpu.pipeline_mode<synchronous>, transform_indices = @transform_4, window_bounds = array<i64: 1, 896>}, {transform_indices = @transform_5, window_bounds = array<i64: 8, 128>}]} {
    %c0 = arith.constant 0 : index
    %c0_0 = arith.constant 0 : index
    %0 = vector.load %arg1[%c0, %c0_0] : memref<8x16xf32, #tpu.memory_space<vmem>>, vector<8x16xf32>
    %1 = arith.truncf %0 : vector<8x16xf32> to vector<8x16xbf16>
    %c0_1 = arith.constant 0 : index
    %c0_2 = arith.constant 0 : index
    %2 = vector.load %arg2[%c0_1, %c0_2] : memref<16x256xbf16, #tpu.memory_space<vmem>>, vector<16x256xbf16>
    %cst = arith.constant dense<0.000000e+00> : vector<8x256xf32>
    %3 = tpu.matmul %1, %2, %cst {dimension_numbers = #tpu.dot_dimension_numbers<[1], [0], [0], [1], [0, 0, 1, 1], [], []>} : vector<8x16xbf16>, vector<16x256xbf16>, vector<8x256xf32> -> vector<8x256xf32>
    %c0_3 = arith.constant 0 : index
    %c0_4 = arith.constant 0 : index
    %4 = vector.load %arg5[%c0_3, %c0_4] : memref<1x896xf32, #tpu.memory_space<vmem>>, vector<1x256xf32>
    %5 = vector.broadcast %4 : vector<1x256xf32> to vector<8x256xf32>
    %6 = arith.addf %3, %5 : vector<8x256xf32>
    %cst_5 = arith.constant 0.000000e+00 : f32
    %7 = vector.broadcast %cst_5 : f32 to vector<8x256xf32>
    %8 = arith.maximumf %6, %7 : vector<8x256xf32>
    %9 = arith.truncf %8 : vector<8x256xf32> to vector<8x256xbf16>
    %c0_6 = arith.constant 0 : index
    %c0_7 = arith.constant 0 : index
    %10 = vector.load %arg3[%c0_6, %c0_7] : memref<256x512xbf16, #tpu.memory_space<vmem>>, vector<256x512xbf16>
    %cst_8 = arith.constant dense<0.000000e+00> : vector<8x512xf32>
    %11 = tpu.matmul %9, %10, %cst_8 {dimension_numbers = #tpu.dot_dimension_numbers<[1], [0], [0], [1], [0, 0, 1, 1], [], []>} : vector<8x256xbf16>, vector<256x512xbf16>, vector<8x512xf32> -> vector<8x512xf32>
    %c0_9 = arith.constant 0 : index
    %c256 = arith.constant 256 : index
    %12 = vector.load %arg5[%c0_9, %c256] : memref<1x896xf32, #tpu.memory_space<vmem>>, vector<1x512xf32>
    %13 = vector.broadcast %12 : vector<1x512xf32> to vector<8x512xf32>
    %14 = arith.addf %11, %13 : vector<8x512xf32>
    %cst_10 = arith.constant 0.000000e+00 : f32
    %15 = vector.broadcast %cst_10 : f32 to vector<8x512xf32>
    %16 = arith.maximumf %14, %15 : vector<8x512xf32>
    %17 = arith.truncf %16 : vector<8x512xf32> to vector<8x512xbf16>
    %c0_11 = arith.constant 0 : index
    %c0_12 = arith.constant 0 : index
    %18 = vector.load %arg4[%c0_11, %c0_12] : memref<512x128xbf16, #tpu.memory_space<vmem>>, vector<512x128xbf16>
    %cst_13 = arith.constant dense<0.000000e+00> : vector<8x128xf32>
    %19 = tpu.matmul %17, %18, %cst_13 {dimension_numbers = #tpu.dot_dimension_numbers<[1], [0], [0], [1], [0, 0, 1, 1], [], []>} : vector<8x512xbf16>, vector<512x128xbf16>, vector<8x128xf32> -> vector<8x128xf32>
    %c0_14 = arith.constant 0 : index
    %c768 = arith.constant 768 : index
    %20 = vector.load %arg5[%c0_14, %c768] : memref<1x896xf32, #tpu.memory_space<vmem>>, vector<1x128xf32>
    %21 = vector.broadcast %20 : vector<1x128xf32> to vector<8x128xf32>
    %22 = arith.addf %19, %21 : vector<8x128xf32>
    %cst_15 = arith.constant -1.000000e+00 : f32
    %cst_16 = arith.constant 1.000000e+00 : f32
    %23 = vector.broadcast %cst_15 : f32 to vector<8x128xf32>
    %24 = arith.maximumf %23, %22 : vector<8x128xf32>
    %25 = vector.broadcast %cst_16 : f32 to vector<8x128xf32>
    %26 = arith.minimumf %25, %24 : vector<8x128xf32>
    %c0_17 = arith.constant 0 : index
    %c0_18 = arith.constant 0 : index
    %27 = vector.load %arg6[%c0_17, %c0_18] : memref<8x128xf32, #tpu.memory_space<vmem>>, vector<8x128xf32>
    tpu.vector_store %arg6[%c0_17, %c0_18], %26 {strides = array<i32>} : memref<8x128xf32, #tpu.memory_space<vmem>>, vector<8x128xf32>,
    return
  }
  func.func @transform_0(%arg0: i32) -> (i32, i32) {
    %c0_i32 = arith.constant 0 : i32
    %c0_i32_0 = arith.constant 0 : i32
    return %arg0, %c0_i32 : i32, i32
  }
  func.func @transform_1(%arg0: i32) -> (i32, i32) {
    %c0_i32 = arith.constant 0 : i32
    %c0_i32_0 = arith.constant 0 : i32
    %c0_i32_1 = arith.constant 0 : i32
    return %c0_i32, %c0_i32_0 : i32, i32
  }
  func.func @transform_2(%arg0: i32) -> (i32, i32) {
    %c0_i32 = arith.constant 0 : i32
    %c0_i32_0 = arith.constant 0 : i32
    %c0_i32_1 = arith.constant 0 : i32
    return %c0_i32, %c0_i32_0 : i32, i32
  }
  func.func @transform_3(%arg0: i32) -> (i32, i32) {
    %c0_i32 = arith.constant 0 : i32
    %c0_i32_0 = arith.constant 0 : i32
    %c0_i32_1 = arith.constant 0 : i32
    return %c0_i32, %c0_i32_0 : i32, i32
  }
  func.func @transform_4(%arg0: i32) -> (i32, i32) {
    %c0_i32 = arith.constant 0 : i32
    %c0_i32_0 = arith.constant 0 : i32
    %c0_i32_1 = arith.constant 0 : i32
    return %c0_i32, %c0_i32_0 : i32, i32
  }
  func.func @transform_5(%arg0: i32) -> (i32, i32) {
    %c0_i32 = arith.constant 0 : i32
    %c0_i32_0 = arith.constant 0 : i32
    return %arg0, %c0_i32 : i32, i32
  }
}

</mosaic_0001>

<llo_original>
// kernel: tpu_custom_call.1
$region0: #{tpu_custom_call.1}
  #allocation0 [shape = 'u32[]', space=smem, size = 0x4, offset = 0x4, fixed_abs, tag = 'smem constant byte address 0x4 - core index']
  #allocation1 [shape = 'u32[144,128]{1,0:T(1,128)}', space=vmem, size = 0x12000, scoped, tag = 'internal scratch']
  %s0 = inlined_call_operand.hbm [shape: f32[8,16], index: 0, kind: input, shape index: {}]
  %s1 = inlined_call_operand.hbm [shape: bf16[16,256], index: 1, kind: input, shape index: {}]
  %s2 = inlined_call_operand.hbm [shape: bf16[256,512], index: 2, kind: input, shape index: {}]
  %s3 = inlined_call_operand.hbm [shape: bf16[512,128], index: 3, kind: input, shape index: {}]
  %s4 = inlined_call_operand.vmem [shape: f32[1,896], index: 4, kind: input, shape index: {}]
  %s5 = inlined_call_operand.hbm [shape: f32[8,128], index: 5, kind: output, shape index: {}]
  %s6 = sld [smem:[#allocation0]]
  $region46: #{tpu_custom_call.1} parent=0
    _
  %s8 = ssub.s32 1, %s6
  %s9 = scalar_select 0, %s8, %s6
  $region1: #{tpu_custom_call.1} parent=0
    #allocation2 [shape = 'u8[4096]{0}', space=vmem, size = 0x1000, scoped, tag = 'input window, operand 0, single buffered']
    #allocation3 [shape = 's32[1]{0}', space=sflag, size = 0x4, scoped, tag = 'scoped memory for tpu_custom_call.1']
    #allocation4 [shape = 's32[1]{0}', space=sflag, size = 0x4, scoped, tag = 'scoped memory for tpu_custom_call.1']
    #allocation5 [shape = 'u8[8192]{0}', space=vmem, size = 0x2000, scoped, tag = 'input window, operand 1, single buffered']
    #allocation6 [shape = 's32[1]{0}', space=sflag, size = 0x4, scoped, tag = 'scoped memory for tpu_custom_call.1']
    #allocation7 [shape = 'u8[262144]{0}', space=vmem, size = 0x40000, scoped, tag = 'input window, operand 2, single buffered']
    #allocation8 [shape = 'u8[131072]{0}', space=vmem, size = 0x20000, scoped, tag = 'input window, operand 3, single buffered']
    #allocation9 [shape = 's32[1]{0}', space=sflag, size = 0x4, scoped, tag = 'scoped memory for tpu_custom_call.1']
    #allocation10 [shape = 'u8[4096]{0}', space=vmem, size = 0x1000, scoped, tag = 'output window, operand 0, single buffered']
    %10 = vsyncpa [#allocation3], 0
    %11 = vsyncpa [#allocation6], 0
    %12 = vsyncpa [#allocation9], 0
    %13 = vsyncpa [#allocation4], 0
    // Predicated region
    $region2: #{tpu_custom_call.1} parent=1 // pred_check
      _
    $region3: #{tpu_custom_call.1} parent=1 // pred_check_branch
      %15 = sbr.rel (0) target = $region5
    $region4: #{tpu_custom_call.1} parent=1 // pred_region
      %s17 = ssub.s32 128, 128
      %18 = vsyncadd [#allocation3], %s17
      %s20 = sshll.u32 [#allocation2], 4
      %s21 = int_to_ptr.vmem [resolvable:$true] %s20
      %23 = dma.hbm_to_vmem [thread:$0]  %s0, 128, %s21, [#allocation3]
    $region5: #{tpu_custom_call.1} parent=1 // pred_fallthru
      _
    // Predicated region
    $region6: #{tpu_custom_call.1} parent=1 // pred_check
      _
    $region7: #{tpu_custom_call.1} parent=1 // pred_check_branch
      %25 = sbr.rel (0) target = $region9
    $region8: #{tpu_custom_call.1} parent=1 // pred_region
      %s27 = ssub.s32 256, 256
      %28 = vsyncadd [#allocation6], %s27
      %s29 = sshll.u32 [#allocation5], 4
      %s30 = int_to_ptr.vmem [resolvable:$true] %s29
      %35 = dma.hbm_to_vmem [thread:$0]  %s1, 256, %s30, [#allocation6], 128, 128, 8
    $region9: #{tpu_custom_call.1} parent=1 // pred_fallthru
      _
    // Predicated region
    $region10: #{tpu_custom_call.1} parent=1 // pred_check
      _
    $region11: #{tpu_custom_call.1} parent=1 // pred_check_branch
      %37 = sbr.rel (0) target = $region13
    $region12: #{tpu_custom_call.1} parent=1 // pred_region
      %s39 = ssub.s32 8192, 8192
      %40 = vsyncadd [#allocation6], %s39
      %s41 = sshll.u32 [#allocation7], 4
      %s42 = int_to_ptr.vmem [resolvable:$true] %s41
      %47 = dma.hbm_to_vmem [thread:$0]  %s2, 8192, %s42, [#allocation6], 256, 256, 16
    $region13: #{tpu_custom_call.1} parent=1 // pred_fallthru
      _
    // Predicated region
    $region14: #{tpu_custom_call.1} parent=1 // pred_check
      _
    $region15: #{tpu_custom_call.1} parent=1 // pred_check_branch
      %49 = sbr.rel (0) target = $region17
    $region16: #{tpu_custom_call.1} parent=1 // pred_region
      %s51 = ssub.s32 4096, 4096
      %52 = vsyncadd [#allocation9], %s51
      %s53 = sshll.u32 [#allocation8], 4
      %s54 = int_to_ptr.vmem [resolvable:$true] %s53
      %59 = dma.hbm_to_vmem [thread:$0]  %s3, 4096, %s54, [#allocation9], 64, 64, 4
    $region17: #{tpu_custom_call.1} parent=1 // pred_fallthru
      _
    // Predicated region
    $region18: #{tpu_custom_call.1} parent=1 // pred_check
      _
    $region19: #{tpu_custom_call.1} parent=1 // pred_check_branch
      %61 = sbr.rel (0) target = $region21
    $region20: #{tpu_custom_call.1} parent=1 // pred_region
      _
    $region21: #{tpu_custom_call.1} parent=1 // pred_fallthru
      _
    // Predicated region
    $region22: #{tpu_custom_call.1} parent=1 // pred_check
      _
    $region23: #{tpu_custom_call.1} parent=1 // pred_check_branch
      %63 = sbr.rel (0) target = $region25
    $region24: #{tpu_custom_call.1} parent=1 // pred_region
      %64 = dma.done [#allocation3], 128
    $region25: #{tpu_custom_call.1} parent=1 // pred_fallthru
      _
    // Predicated region
    $region26: #{tpu_custom_call.1} parent=1 // pred_check
      _
    $region27: #{tpu_custom_call.1} parent=1 // pred_check_branch
      %66 = sbr.rel (0) target = $region29
    $region28: #{tpu_custom_call.1} parent=1 // pred_region
      %67 = dma.done [#allocation6], 256
    $region29: #{tpu_custom_call.1} parent=1 // pred_fallthru
      _
    // Predicated region
    $region30: #{tpu_custom_call.1} parent=1 // pred_check
      _
    $region31: #{tpu_custom_call.1} parent=1 // pred_check_branch
      %69 = sbr.rel (0) target = $region33
    $region32: #{tpu_custom_call.1} parent=1 // pred_region
      %70 = dma.done [#allocation6], 8192
    $region33: #{tpu_custom_call.1} parent=1 // pred_fallthru
      _
    // Predicated region
    $region34: #{tpu_custom_call.1} parent=1 // pred_check
      _
    $region35: #{tpu_custom_call.1} parent=1 // pred_check_branch
      %72 = sbr.rel (0) target = $region37
    $region36: #{tpu_custom_call.1} parent=1 // pred_region
      %73 = dma.done [#allocation9], 4096
    $region37: #{tpu_custom_call.1} parent=1 // pred_fallthru
      _
    %v75 = vld [vmem:[#allocation2] sm:$0xff]
    %v76 = vpack.c.bf16 %v75, %v75
    %v77 = vld [vmem:[#allocation5] sm:$0xff]
    %v78 = vld [vmem:[#allocation5 + $0x8] sm:$0xff]
    %v79 = vld [vmem:[%s4] sm:$0x3]
    %v81 = vlaneseq
    %v82 = vshrl.u32 %v81, 7
    %v83 = vsub.s32 0, %v82
    %v84 = vrot.slane %v79, %v83
    %v85 = vlaneseq
    %v86 = vshrl.u32 %v85, 7
    %v87 = vsub.s32 1, %v86
    %v88 = vrot.slane %v79, %v87
    %v93 = vunpack.c.l.b16 %v77
    %v94 = vunpack.c.h.b16 %v77
    %v95 = vunpack.c.l.b16 %v78
    %v96 = vunpack.c.h.b16 %v78
    %v97 = vpack.c.b16 %v95, %v93
    %v98 = vpack.c.b16 %v96, %v94
    %vm101 = vcmask 130048
    %v103 = vsel %vm101, %v76, 0
    %105 = vmatprep.subr.bf16.mxu0 0
    %106 = vmatpush1.bf16.msra.mxu0 0
    %107 = vmatprep.subr.bf16.mxu0 0
    %108 = vmatpush1.bf16.msra.mxu0 0
    %109 = vmatprep.subr.bf16.mxu0 0
    %110 = vmatpush1.bf16.msra.mxu0 0
    %111 = vmatprep.subr.bf16.mxu0 0
    %112 = vmatpush1.bf16.msra.mxu0 0
    %113 = vmatprep.subr.bf16.mxu0 0
    %114 = vmatpush1.bf16.msra.mxu0 0
    %115 = vmatprep.subr.bf16.mxu0 0
    %116 = vmatpush1.bf16.msra.mxu0 0
    %117 = vmatprep.subr.bf16.mxu0 0
    %118 = vmatpush1.bf16.msra.mxu0 0
    %119 = vmatprep.subr.bf16.mxu0 %v98
    %120 = vmatpush1.bf16.msra.mxu0 %v97
    %121 = vmatprep.subr.bf16.mxu0 0
    %122 = vmatpush2.bf16.msra.mxu0 0
    %123 = vmatprep.subr.bf16.mxu0 0
    %124 = vmatpush2.bf16.msra.mxu0 0
    %125 = vmatprep.subr.bf16.mxu0 0
    %126 = vmatpush2.bf16.msra.mxu0 0
    %127 = vmatprep.subr.bf16.mxu0 0
    %128 = vmatpush2.bf16.msra.mxu0 0
    %129 = vmatprep.subr.bf16.mxu0 0
    %130 = vmatpush2.bf16.msra.mxu0 0
    %131 = vmatprep.subr.bf16.mxu0 0
    %132 = vmatpush2.bf16.msra.mxu0 0
    %133 = vmatprep.subr.bf16.mxu0 0
    %134 = vmatpush2.bf16.msra.mxu0 0
    %135 = vmatprep.subr.bf16.mxu0 0
    %136 = vmatpush2.bf16.msra.mxu0 0
    %137 = vmatprep.mubr.bf16.mxu0 0
    %138 = vmatmul.mubr.bf16.gmra.mxu0 %v103
    %v139 = vpop.f32.mrf.mxu0
    %v140 = vadd.f32 %v84, %v139
    %v141 = vpop.f32.mrf.mxu0
    %v142 = vadd.f32 %v88, %v141
    %v143 = vpop.f32.mrf.mxu0
    %v144 = vpop.f32.mrf.mxu0
    %145 = vdwg.mxu0
    %v146 = vmax.f32 %v140, 0.0
    %v147 = vmax.f32 %v142, 0.0
    %v148 = vpack.c.bf16 %v146, %v146
    %v149 = vpack.c.bf16 %v147, %v147
    %v150 = vld [vmem:[#allocation7] sm:$0xff]
    %v151 = vld [vmem:[#allocation7 + $0x8] sm:$0xff]
    %v152 = vld [vmem:[#allocation7 + $0x10] sm:$0xff]
    %v153 = vld [vmem:[#allocation7 + $0x18] sm:$0xff]
    %v154 = vld [vmem:[#allocation7 + $0x20] sm:$0xff]
    %v155 = vld [vmem:[#allocation7 + $0x28] sm:$0xff]
    %v156 = vld [vmem:[#allocation7 + $0x30] sm:$0xff]
    %v157 = vld [vmem:[#allocation7 + $0x38] sm:$0xff]
    %v158 = vld [vmem:[#allocation7 + $0x40] sm:$0xff]
    %v159 = vld [vmem:[#allocation7 + $0x48] sm:$0xff]
    %v160 = vld [vmem:[#allocation7 + $0x50] sm:$0xff]
    %v161 = vld [vmem:[#allocation7 + $0x58] sm:$0xff]
    %v162 = vld [vmem:[#allocation7 + $0x60] sm:$0xff]
    %v163 = vld [vmem:[#allocation7 + $0x68] sm:$0xff]
    %v164 = vld [vmem:[#allocation7 + $0x70] sm:$0xff]
    %v165 = vld [vmem:[#allocation7 + $0x78] sm:$0xff]
    %v166 = vld [vmem:[#allocation7 + $0x80] sm:$0xff]
    %v167 = vld [vmem:[#allocation7 + $0x88] sm:$0xff]
    %v168 = vld [vmem:[#allocation7 + $0x90] sm:$0xff]
    %v169 = vld [vmem:[#allocation7 + $0x98] sm:$0xff]
    %v170 = vld [vmem:[#allocation7 + $0xa0] sm:$0xff]
    %v171 = vld [vmem:[#allocation7 + $0xa8] sm:$0xff]
    %v172 = vld [vmem:[#allocation7 + $0xb0] sm:$0xff]
    %v173 = vld [vmem:[#allocation7 + $0xb8] sm:$0xff]
    %v174 = vld [vmem:[#allocation7 + $0xc0] sm:$0xff]
    %v175 = vld [vmem:[#allocation7 + $0xc8] sm:$0xff]
    %v176 = vld [vmem:[#allocation7 + $0xd0] sm:$0xff]
    %v177 = vld [vmem:[#allocation7 + $0xd8] sm:$0xff]
    %v178 = vld [vmem:[#allocation7 + $0xe0] sm:$0xff]
    %v179 = vld [vmem:[#allocation7 + $0xe8] sm:$0xff]
    %v180 = vld [vmem:[#allocation7 + $0xf0] sm:$0xff]
    %v181 = vld [vmem:[#allocation7 + $0xf8] sm:$0xff]
    %v182 = vld [vmem:[#allocation7 + $0x100] sm:$0xff]
    %v183 = vld [vmem:[#allocation7 + $0x108] sm:$0xff]
    %v184 = vld [vmem:[#allocation7 + $0x110] sm:$0xff]
    %v185 = vld [vmem:[#allocation7 + $0x118] sm:$0xff]
    %v186 = vld [vmem:[#allocation7 + $0x120] sm:$0xff]
    %v187 = vld [vmem:[#allocation7 + $0x128] sm:$0xff]
    %v188 = vld [vmem:[#allocation7 + $0x130] sm:$0xff]
    %v189 = vld [vmem:[#allocation7 + $0x138] sm:$0xff]
    %v190 = vld [vmem:[#allocation7 + $0x140] sm:$0xff]
    %v191 = vld [vmem:[#allocation7 + $0x148] sm:$0xff]
    %v192 = vld [vmem:[#allocation7 + $0x150] sm:$0xff]
    %v193 = vld [vmem:[#allocation7 + $0x158] sm:$0xff]
    %v194 = vld [vmem:[#allocation7 + $0x160] sm:$0xff]
    %v195 = vld [vmem:[#allocation7 + $0x168] sm:$0xff]
    %v196 = vld [vmem:[#allocation7 + $0x170] sm:$0xff]
    %v197 = vld [vmem:[#allocation7 + $0x178] sm:$0xff]
    %v198 = vld [vmem:[#allocation7 + $0x180] sm:$0xff]
    %v199 = vld [vmem:[#allocation7 + $0x188] sm:$0xff]
    %v200 = vld [vmem:[#allocation7 + $0x190] sm:$0xff]
    %v201 = vld [vmem:[#allocation7 + $0x198] sm:$0xff]
    %v202 = vld [vmem:[#allocation7 + $0x1a0] sm:$0xff]
    %v203 = vld [vmem:[#allocation7 + $0x1a8] sm:$0xff]
    %v204 = vld [vmem:[#allocation7 + $0x1b0] sm:$0xff]
    %v205 = vld [vmem:[#allocation7 + $0x1b8] sm:$0xff]
    %v206 = vld [vmem:[#allocation7 + $0x1c0] sm:$0xff]
    %v207 = vld [vmem:[#allocation7 + $0x1c8] sm:$0xff]
    %v208 = vld [vmem:[#allocation7 + $0x1d0] sm:$0xff]
    %v209 = vld [vmem:[#allocation7 + $0x1d8] sm:$0xff]
    %v210 = vld [vmem:[#allocation7 + $0x1e0] sm:$0xff]
    %v211 = vld [vmem:[#allocation7 + $0x1e8] sm:$0xff]
    %v212 = vld [vmem:[#allocation7 + $0x1f0] sm:$0xff]
    %v213 = vld [vmem:[#allocation7 + $0x1f8] sm:$0xff]
    %v214 = vld [vmem:[%s4 + $0x2] sm:$0xf]
    %v216 = vlaneseq
    %v217 = vshrl.u32 %v216, 7
    %v218 = vsub.s32 0, %v217
    %v219 = vrot.slane %v214, %v218
    %v220 = vlaneseq
    %v221 = vshrl.u32 %v220, 7
    %v222 = vsub.s32 1, %v221
    %v223 = vrot.slane %v214, %v222
    %v224 = vlaneseq
    %v225 = vshrl.u32 %v224, 7
    %v226 = vsub.s32 2, %v225
    %v227 = vrot.slane %v214, %v226
    %v228 = vlaneseq
    %v229 = vshrl.u32 %v228, 7
    %v230 = vsub.s32 3, %v229
    %v231 = vrot.slane %v214, %v230
    %v300 = vunpack.c.l.b16 %v150
    %v301 = vunpack.c.h.b16 %v150
    %v302 = vunpack.c.l.b16 %v151
    %v303 = vunpack.c.h.b16 %v151
    %v304 = vunpack.c.l.b16 %v152
    %v305 = vunpack.c.h.b16 %v152
    %v306 = vunpack.c.l.b16 %v153
    %v307 = vunpack.c.h.b16 %v153
    %v308 = vunpack.c.l.b16 %v154
    %v309 = vunpack.c.h.b16 %v154
    %v310 = vunpack.c.l.b16 %v155
    %v311 = vunpack.c.h.b16 %v155
    %v312 = vunpack.c.l.b16 %v156
    %v313 = vunpack.c.h.b16 %v156
    %v314 = vunpack.c.l.b16 %v157
    %v315 = vunpack.c.h.b16 %v157
    %v316 = vunpack.c.l.b16 %v158
    %v317 = vunpack.c.h.b16 %v158
    %v318 = vunpack.c.l.b16 %v159
    %v319 = vunpack.c.h.b16 %v159
    %v320 = vunpack.c.l.b16 %v160
    %v321 = vunpack.c.h.b16 %v160
    %v322 = vunpack.c.l.b16 %v161
    %v323 = vunpack.c.h.b16 %v161
    %v324 = vunpack.c.l.b16 %v162
    %v325 = vunpack.c.h.b16 %v162
    %v326 = vunpack.c.l.b16 %v163
    %v327 = vunpack.c.h.b16 %v163
    %v328 = vunpack.c.l.b16 %v164
    %v329 = vunpack.c.h.b16 %v164
    %v330 = vunpack.c.l.b16 %v165
    %v331 = vunpack.c.h.b16 %v165
    %v332 = vunpack.c.l.b16 %v166
    %v333 = vunpack.c.h.b16 %v166
    %v334 = vunpack.c.l.b16 %v167
    %v335 = vunpack.c.h.b16 %v167
    %v336 = vunpack.c.l.b16 %v168
    %v337 = vunpack.c.h.b16 %v168
    %v338 = vunpack.c.l.b16 %v169
    %v339 = vunpack.c.h.b16 %v169
    %v340 = vunpack.c.l.b16 %v170
    %v341 = vunpack.c.h.b16 %v170
    %v342 = vunpack.c.l.b16 %v171
    %v343 = vunpack.c.h.b16 %v171
    %v344 = vunpack.c.l.b16 %v172
    %v345 = vunpack.c.h.b16 %v172
    %v346 = vunpack.c.l.b16 %v173
    %v347 = vunpack.c.h.b16 %v173
    %v348 = vunpack.c.l.b16 %v174
    %v349 = vunpack.c.h.b16 %v174
    %v350 = vunpack.c.l.b16 %v175
    %v351 = vunpack.c.h.b16 %v175
    %v352 = vunpack.c.l.b16 %v176
    %v353 = vunpack.c.h.b16 %v176
    %v354 = vunpack.c.l.b16 %v177
    %v355 = vunpack.c.h.b16 %v177
    %v356 = vunpack.c.l.b16 %v178
    %v357 = vunpack.c.h.b16 %v178
    %v358 = vunpack.c.l.b16 %v179
    %v359 = vunpack.c.h.b16 %v179
    %v360 = vunpack.c.l.b16 %v180
    %v361 = vunpack.c.h.b16 %v180
    %v362 = vunpack.c.l.b16 %v181
    %v363 = vunpack.c.h.b16 %v181
    %v364 = vunpack.c.l.b16 %v182
    %v365 = vunpack.c.h.b16 %v182
    %v366 = vunpack.c.l.b16 %v183
    %v367 = vunpack.c.h.b16 %v183
    %v368 = vunpack.c.l.b16 %v184
    %v369 = vunpack.c.h.b16 %v184
    %v370 = vunpack.c.l.b16 %v185
    %v371 = vunpack.c.h.b16 %v185
    %v372 = vunpack.c.l.b16 %v186
    %v373 = vunpack.c.h.b16 %v186
    %v374 = vunpack.c.l.b16 %v187
    %v375 = vunpack.c.h.b16 %v187
    %v376 = vunpack.c.l.b16 %v188
    %v377 = vunpack.c.h.b16 %v188
    %v378 = vunpack.c.l.b16 %v189
    %v379 = vunpack.c.h.b16 %v189
    %v380 = vunpack.c.l.b16 %v190
    %v381 = vunpack.c.h.b16 %v190
    %v382 = vunpack.c.l.b16 %v191
    %v383 = vunpack.c.h.b16 %v191
    %v384 = vunpack.c.l.b16 %v192
    %v385 = vunpack.c.h.b16 %v192
    %v386 = vunpack.c.l.b16 %v193
    %v387 = vunpack.c.h.b16 %v193
    %v388 = vunpack.c.l.b16 %v194
    %v389 = vunpack.c.h.b16 %v194
    %v390 = vunpack.c.l.b16 %v195
    %v391 = vunpack.c.h.b16 %v195
    %v392 = vunpack.c.l.b16 %v196
    %v393 = vunpack.c.h.b16 %v196
    %v394 = vunpack.c.l.b16 %v197
    %v395 = vunpack.c.h.b16 %v197
    %v396 = vunpack.c.l.b16 %v198
    %v397 = vunpack.c.h.b16 %v198
    %v398 = vunpack.c.l.b16 %v199
    %v399 = vunpack.c.h.b16 %v199
    %v400 = vunpack.c.l.b16 %v200
    %v401 = vunpack.c.h.b16 %v200
    %v402 = vunpack.c.l.b16 %v201
    %v403 = vunpack.c.h.b16 %v201
    %v404 = vunpack.c.l.b16 %v202
    %v405 = vunpack.c.h.b16 %v202
    %v406 = vunpack.c.l.b16 %v203
    %v407 = vunpack.c.h.b16 %v203
    %v408 = vunpack.c.l.b16 %v204
    %v409 = vunpack.c.h.b16 %v204
    %v410 = vunpack.c.l.b16 %v205
    %v411 = vunpack.c.h.b16 %v205
    %v412 = vunpack.c.l.b16 %v206
    %v413 = vunpack.c.h.b16 %v206
    %v414 = vunpack.c.l.b16 %v207
    %v415 = vunpack.c.h.b16 %v207
    %v416 = vunpack.c.l.b16 %v208
    %v417 = vunpack.c.h.b16 %v208
    %v418 = vunpack.c.l.b16 %v209
    %v419 = vunpack.c.h.b16 %v209
    %v420 = vunpack.c.l.b16 %v210
    %v421 = vunpack.c.h.b16 %v210
    %v422 = vunpack.c.l.b16 %v211
    %v423 = vunpack.c.h.b16 %v211
    %v424 = vunpack.c.l.b16 %v212
    %v425 = vunpack.c.h.b16 %v212
    %v426 = vunpack.c.l.b16 %v213
    %v427 = vunpack.c.h.b16 %v213
    %v428 = vpack.c.b16 %v304, %v300
    %v429 = vpack.c.b16 %v305, %v301
    %v430 = vpack.c.b16 %v306, %v302
    %v431 = vpack.c.b16 %v307, %v303
    %v432 = vpack.c.b16 %v312, %v308
    %v433 = vpack.c.b16 %v313, %v309
    %v434 = vpack.c.b16 %v314, %v310
    %v435 = vpack.c.b16 %v315, %v311
    %v436 = vpack.c.b16 %v320, %v316
    %v437 = vpack.c.b16 %v321, %v317
    %v438 = vpack.c.b16 %v322, %v318
    %v439 = vpack.c.b16 %v323, %v319
    %v440 = vpack.c.b16 %v328, %v324
    %v441 = vpack.c.b16 %v329, %v325
    %v442 = vpack.c.b16 %v330, %v326
    %v443 = vpack.c.b16 %v331, %v327
    %v444 = vpack.c.b16 %v336, %v332
    %v445 = vpack.c.b16 %v337, %v333
    %v446 = vpack.c.b16 %v338, %v334
    %v447 = vpack.c.b16 %v339, %v335
    %v448 = vpack.c.b16 %v344, %v340
    %v449 = vpack.c.b16 %v345, %v341
    %v450 = vpack.c.b16 %v346, %v342
    %v451 = vpack.c.b16 %v347, %v343
    %v452 = vpack.c.b16 %v352, %v348
    %v453 = vpack.c.b16 %v353, %v349
    %v454 = vpack.c.b16 %v354, %v350
    %v455 = vpack.c.b16 %v355, %v351
    %v456 = vpack.c.b16 %v360, %v356
    %v457 = vpack.c.b16 %v361, %v357
    %v458 = vpack.c.b16 %v362, %v358
    %v459 = vpack.c.b16 %v363, %v359
    %v460 = vpack.c.b16 %v368, %v364
    %v461 = vpack.c.b16 %v369, %v365
    %v462 = vpack.c.b16 %v370, %v366
    %v463 = vpack.c.b16 %v371, %v367
    %v464 = vpack.c.b16 %v376, %v372
    %v465 = vpack.c.b16 %v377, %v373
    %v466 = vpack.c.b16 %v378, %v374
    %v467 = vpack.c.b16 %v379, %v375
    %v468 = vpack.c.b16 %v384, %v380
    %v469 = vpack.c.b16 %v385, %v381
    %v470 = vpack.c.b16 %v386, %v382
    %v471 = vpack.c.b16 %v387, %v383
    %v472 = vpack.c.b16 %v392, %v388
    %v473 = vpack.c.b16 %v393, %v389
    %v474 = vpack.c.b16 %v394, %v390
    %v475 = vpack.c.b16 %v395, %v391
    %v476 = vpack.c.b16 %v400, %v396
    %v477 = vpack.c.b16 %v401, %v397
    %v478 = vpack.c.b16 %v402, %v398
    %v479 = vpack.c.b16 %v403, %v399
    %v480 = vpack.c.b16 %v408, %v404
    %v481 = vpack.c.b16 %v409, %v405
    %v482 = vpack.c.b16 %v410, %v406
    %v483 = vpack.c.b16 %v411, %v407
    %v484 = vpack.c.b16 %v416, %v412
    %v485 = vpack.c.b16 %v417, %v413
    %v486 = vpack.c.b16 %v418, %v414
    %v487 = vpack.c.b16 %v419, %v415
    %v488 = vpack.c.b16 %v424, %v420
    %v489 = vpack.c.b16 %v425, %v421
    %v490 = vpack.c.b16 %v426, %v422
    %v491 = vpack.c.b16 %v427, %v423
    %556 = vmatprep.subr.bf16.mxu0 %v457
    %557 = vmatpush1.bf16.msra.mxu0 %v456
    %558 = vmatprep.subr.bf16.mxu0 %v453
    %559 = vmatpush1.bf16.msra.mxu0 %v452
    %560 = vmatprep.subr.bf16.mxu0 %v449
    %561 = vmatpush1.bf16.msra.mxu0 %v448
    %562 = vmatprep.subr.bf16.mxu0 %v445
    %563 = vmatpush1.bf16.msra.mxu0 %v444
    %564 = vmatprep.subr.bf16.mxu0 %v441
    %565 = vmatpush1.bf16.msra.mxu0 %v440
    %566 = vmatprep.subr.bf16.mxu0 %v437
    %567 = vmatpush1.bf16.msra.mxu0 %v436
    %568 = vmatprep.subr.bf16.mxu0 %v433
    %569 = vmatpush1.bf16.msra.mxu0 %v432
    %570 = vmatprep.subr.bf16.mxu0 %v429
    %571 = vmatpush1.bf16.msra.mxu0 %v428
    %572 = vmatprep.subr.bf16.mxu0 %v489
    %573 = vmatpush2.bf16.msra.mxu0 %v488
    %574 = vmatprep.subr.bf16.mxu0 %v485
    %575 = vmatpush2.bf16.msra.mxu0 %v484
    %576 = vmatprep.subr.bf16.mxu0 %v481
    %577 = vmatpush2.bf16.msra.mxu0 %v480
    %578 = vmatprep.subr.bf16.mxu0 %v477
    %579 = vmatpush2.bf16.msra.mxu0 %v476
    %580 = vmatprep.subr.bf16.mxu0 %v473
    %581 = vmatpush2.bf16.msra.mxu0 %v472
    %582 = vmatprep.subr.bf16.mxu0 %v469
    %583 = vmatpush2.bf16.msra.mxu0 %v468
    %584 = vmatprep.subr.bf16.mxu0 %v465
    %585 = vmatpush2.bf16.msra.mxu0 %v464
    %586 = vmatprep.subr.bf16.mxu0 %v461
    %587 = vmatpush2.bf16.msra.mxu0 %v460
    %588 = vmatprep.mubr.bf16.mxu0 %v149
    %589 = vmatmul.mubr.bf16.gmra.mxu0 %v148
    %v590 = vpop.f32.mrf.mxu0
    %v591 = vadd.f32 %v219, %v590
    %v592 = vpop.f32.mrf.mxu0
    %v593 = vadd.f32 %v223, %v592
    %v594 = vpop.f32.mrf.mxu0
    %v595 = vpop.f32.mrf.mxu0
    %596 = vdwg.mxu0
    %597 = vmatprep.subr.bf16.mxu0 %v459
    %598 = vmatpush1.bf16.msra.mxu0 %v458
    %599 = vmatprep.subr.bf16.mxu0 %v455
    %600 = vmatpush1.bf16.msra.mxu0 %v454
    %601 = vmatprep.subr.bf16.mxu0 %v451
    %602 = vmatpush1.bf16.msra.mxu0 %v450
    %603 = vmatprep.subr.bf16.mxu0 %v447
    %604 = vmatpush1.bf16.msra.mxu0 %v446
    %605 = vmatprep.subr.bf16.mxu0 %v443
    %606 = vmatpush1.bf16.msra.mxu0 %v442
    %607 = vmatprep.subr.bf16.mxu0 %v439
    %608 = vmatpush1.bf16.msra.mxu0 %v438
    %609 = vmatprep.subr.bf16.mxu0 %v435
    %610 = vmatpush1.bf16.msra.mxu0 %v434
    %611 = vmatprep.subr.bf16.mxu0 %v431
    %612 = vmatpush1.bf16.msra.mxu0 %v430
    %613 = vmatprep.subr.bf16.mxu0 %v491
    %614 = vmatpush2.bf16.msra.mxu0 %v490
    %615 = vmatprep.subr.bf16.mxu0 %v487
    %616 = vmatpush2.bf16.msra.mxu0 %v486
    %617 = vmatprep.subr.bf16.mxu0 %v483
    %618 = vmatpush2.bf16.msra.mxu0 %v482
    %619 = vmatprep.subr.bf16.mxu0 %v479
    %620 = vmatpush2.bf16.msra.mxu0 %v478
    %621 = vmatprep.subr.bf16.mxu0 %v475
    %622 = vmatpush2.bf16.msra.mxu0 %v474
    %623 = vmatprep.subr.bf16.mxu0 %v471
    %624 = vmatpush2.bf16.msra.mxu0 %v470
    %625 = vmatprep.subr.bf16.mxu0 %v467
    %626 = vmatpush2.bf16.msra.mxu0 %v466
    %627 = vmatprep.subr.bf16.mxu0 %v463
    %628 = vmatpush2.bf16.msra.mxu0 %v462
    %629 = vmatprep.mubr.bf16.mxu0 %v149
    %630 = vmatmul.mubr.bf16.gmra.mxu0 %v148
    %v631 = vpop.f32.mrf.mxu0
    %v632 = vadd.f32 %v227, %v631
    %v633 = vpop.f32.mrf.mxu0
    %v634 = vadd.f32 %v231, %v633
    %v635 = vpop.f32.mrf.mxu0
    %v636 = vpop.f32.mrf.mxu0
    %637 = vdwg.mxu0
    %v638 = vmax.f32 %v591, 0.0
    %v639 = vmax.f32 %v593, 0.0
    %v640 = vmax.f32 %v632, 0.0
    %v641 = vmax.f32 %v634, 0.0
    %v642 = vpack.c.bf16 %v638, %v638
    %v643 = vpack.c.bf16 %v639, %v639
    %v644 = vpack.c.bf16 %v640, %v640
    %v645 = vpack.c.bf16 %v641, %v641
    %v646 = vld [vmem:[#allocation8] sm:$0xf]
    %v647 = vld [vmem:[#allocation8 + $0x4] sm:$0xf]
    %v648 = vld [vmem:[#allocation8 + $0x8] sm:$0xf]
    %v649 = vld [vmem:[#allocation8 + $0xc] sm:$0xf]
    %v650 = vld [vmem:[#allocation8 + $0x10] sm:$0xf]
    %v651 = vld [vmem:[#allocation8 + $0x14] sm:$0xf]
    %v652 = vld [vmem:[#allocation8 + $0x18] sm:$0xf]
    %v653 = vld [vmem:[#allocation8 + $0x1c] sm:$0xf]
    %v654 = vld [vmem:[#allocation8 + $0x20] sm:$0xf]
    %v655 = vld [vmem:[#allocation8 + $0x24] sm:$0xf]
    %v656 = vld [vmem:[#allocation8 + $0x28] sm:$0xf]
    %v657 = vld [vmem:[#allocation8 + $0x2c] sm:$0xf]
    %v658 = vld [vmem:[#allocation8 + $0x30] sm:$0xf]
    %v659 = vld [vmem:[#allocation8 + $0x34] sm:$0xf]
    %v660 = vld [vmem:[#allocation8 + $0x38] sm:$0xf]
    %v661 = vld [vmem:[#allocation8 + $0x3c] sm:$0xf]
    %v662 = vld [vmem:[#allocation8 + $0x40] sm:$0xf]
    %v663 = vld [vmem:[#allocation8 + $0x44] sm:$0xf]
    %v664 = vld [vmem:[#allocation8 + $0x48] sm:$0xf]
    %v665 = vld [vmem:[#allocation8 + $0x4c] sm:$0xf]
    %v666 = vld [vmem:[#allocation8 + $0x50] sm:$0xf]
    %v667 = vld [vmem:[#allocation8 + $0x54] sm:$0xf]
    %v668 = vld [vmem:[#allocation8 + $0x58] sm:$0xf]
    %v669 = vld [vmem:[#allocation8 + $0x5c] sm:$0xf]
    %v670 = vld [vmem:[#allocation8 + $0x60] sm:$0xf]
    %v671 = vld [vmem:[#allocation8 + $0x64] sm:$0xf]
    %v672 = vld [vmem:[#allocation8 + $0x68] sm:$0xf]
    %v673 = vld [vmem:[#allocation8 + $0x6c] sm:$0xf]
    %v674 = vld [vmem:[#allocation8 + $0x70] sm:$0xf]
    %v675 = vld [vmem:[#allocation8 + $0x74] sm:$0xf]
    %v676 = vld [vmem:[#allocation8 + $0x78] sm:$0xf]
    %v677 = vld [vmem:[#allocation8 + $0x7c] sm:$0xf]
    %v678 = vld [vmem:[#allocation8 + $0x80] sm:$0xf]
    %v679 = vld [vmem:[#allocation8 + $0x84] sm:$0xf]
    %v680 = vld [vmem:[#allocation8 + $0x88] sm:$0xf]
    %v681 = vld [vmem:[#allocation8 + $0x8c] sm:$0xf]
    %v682 = vld [vmem:[#allocation8 + $0x90] sm:$0xf]
    %v683 = vld [vmem:[#allocation8 + $0x94] sm:$0xf]
    %v684 = vld [vmem:[#allocation8 + $0x98] sm:$0xf]
    %v685 = vld [vmem:[#allocation8 + $0x9c] sm:$0xf]
    %v686 = vld [vmem:[#allocation8 + $0xa0] sm:$0xf]
    %v687 = vld [vmem:[#allocation8 + $0xa4] sm:$0xf]
    %v688 = vld [vmem:[#allocation8 + $0xa8] sm:$0xf]
    %v689 = vld [vmem:[#allocation8 + $0xac] sm:$0xf]
    %v690 = vld [vmem:[#allocation8 + $0xb0] sm:$0xf]
    %v691 = vld [vmem:[#allocation8 + $0xb4] sm:$0xf]
    %v692 = vld [vmem:[#allocation8 + $0xb8] sm:$0xf]
    %v693 = vld [vmem:[#allocation8 + $0xbc] sm:$0xf]
    %v694 = vld [vmem:[#allocation8 + $0xc0] sm:$0xf]
    %v695 = vld [vmem:[#allocation8 + $0xc4] sm:$0xf]
    %v696 = vld [vmem:[#allocation8 + $0xc8] sm:$0xf]
    %v697 = vld [vmem:[#allocation8 + $0xcc] sm:$0xf]
    %v698 = vld [vmem:[#allocation8 + $0xd0] sm:$0xf]
    %v699 = vld [vmem:[#allocation8 + $0xd4] sm:$0xf]
    %v700 = vld [vmem:[#allocation8 + $0xd8] sm:$0xf]
    %v701 = vld [vmem:[#allocation8 + $0xdc] sm:$0xf]
    %v702 = vld [vmem:[#allocation8 + $0xe0] sm:$0xf]
    %v703 = vld [vmem:[#allocation8 + $0xe4] sm:$0xf]
    %v704 = vld [vmem:[#allocation8 + $0xe8] sm:$0xf]
    %v705 = vld [vmem:[#allocation8 + $0xec] sm:$0xf]
    %v706 = vld [vmem:[#allocation8 + $0xf0] sm:$0xf]
    %v707 = vld [vmem:[#allocation8 + $0xf4] sm:$0xf]
    %v708 = vld [vmem:[#allocation8 + $0xf8] sm:$0xf]
    %v709 = vld [vmem:[#allocation8 + $0xfc] sm:$0xf]
    %v710 = vld [vmem:[%s4 + $0x6] sm:$0x1]
    %v712 = vlaneseq
    %v713 = vshrl.u32 %v712, 7
    %v714 = vsub.s32 0, %v713
    %v715 = vrot.slane %v710, %v714
    %v781 = vunpack.c.l.b16 %v646
    %v782 = vunpack.c.l.b16 %v647
    %v783 = vunpack.c.l.b16 %v648
    %v784 = vunpack.c.l.b16 %v649
    %v785 = vunpack.c.l.b16 %v650
    %v786 = vunpack.c.l.b16 %v651
    %v787 = vunpack.c.l.b16 %v652
    %v788 = vunpack.c.l.b16 %v653
    %v789 = vunpack.c.l.b16 %v654
    %v790 = vunpack.c.l.b16 %v655
    %v791 = vunpack.c.l.b16 %v656
    %v792 = vunpack.c.l.b16 %v657
    %v793 = vunpack.c.l.b16 %v658
    %v794 = vunpack.c.l.b16 %v659
    %v795 = vunpack.c.l.b16 %v660
    %v796 = vunpack.c.l.b16 %v661
    %v797 = vunpack.c.l.b16 %v662
    %v798 = vunpack.c.l.b16 %v663
    %v799 = vunpack.c.l.b16 %v664
    %v800 = vunpack.c.l.b16 %v665
    %v801 = vunpack.c.l.b16 %v666
    %v802 = vunpack.c.l.b16 %v667
    %v803 = vunpack.c.l.b16 %v668
    %v804 = vunpack.c.l.b16 %v669
    %v805 = vunpack.c.l.b16 %v670
    %v806 = vunpack.c.l.b16 %v671
    %v807 = vunpack.c.l.b16 %v672
    %v808 = vunpack.c.l.b16 %v673
    %v809 = vunpack.c.l.b16 %v674
    %v810 = vunpack.c.l.b16 %v675
    %v811 = vunpack.c.l.b16 %v676
    %v812 = vunpack.c.l.b16 %v677
    %v813 = vunpack.c.l.b16 %v678
    %v814 = vunpack.c.l.b16 %v679
    %v815 = vunpack.c.l.b16 %v680
    %v816 = vunpack.c.l.b16 %v681
    %v817 = vunpack.c.l.b16 %v682
    %v818 = vunpack.c.l.b16 %v683
    %v819 = vunpack.c.l.b16 %v684
    %v820 = vunpack.c.l.b16 %v685
    %v821 = vunpack.c.l.b16 %v686
    %v822 = vunpack.c.l.b16 %v687
    %v823 = vunpack.c.l.b16 %v688
    %v824 = vunpack.c.l.b16 %v689
    %v825 = vunpack.c.l.b16 %v690
    %v826 = vunpack.c.l.b16 %v691
    %v827 = vunpack.c.l.b16 %v692
    %v828 = vunpack.c.l.b16 %v693
    %v829 = vunpack.c.l.b16 %v694
    %v830 = vunpack.c.l.b16 %v695
    %v831 = vunpack.c.l.b16 %v696
    %v832 = vunpack.c.l.b16 %v697
    %v833 = vunpack.c.l.b16 %v698
    %v834 = vunpack.c.l.b16 %v699
    %v835 = vunpack.c.l.b16 %v700
    %v836 = vunpack.c.l.b16 %v701
    %v837 = vunpack.c.l.b16 %v702
    %v838 = vunpack.c.l.b16 %v703
    %v839 = vunpack.c.l.b16 %v704
    %v840 = vunpack.c.l.b16 %v705
    %v841 = vunpack.c.l.b16 %v706
    %v842 = vunpack.c.l.b16 %v707
    %v843 = vunpack.c.l.b16 %v708
    %v844 = vunpack.c.l.b16 %v709
    %v845 = vpack.c.b16 %v782, %v781
    %v846 = vpack.c.b16 %v784, %v783
    %v847 = vpack.c.b16 %v786, %v785
    %v848 = vpack.c.b16 %v788, %v787
    %v849 = vpack.c.b16 %v790, %v789
    %v850 = vpack.c.b16 %v792, %v791
    %v851 = vpack.c.b16 %v794, %v793
    %v852 = vpack.c.b16 %v796, %v795
    %v853 = vpack.c.b16 %v798, %v797
    %v854 = vpack.c.b16 %v800, %v799
    %v855 = vpack.c.b16 %v802, %v801
    %v856 = vpack.c.b16 %v804, %v803
    %v857 = vpack.c.b16 %v806, %v805
    %v858 = vpack.c.b16 %v808, %v807
    %v859 = vpack.c.b16 %v810, %v809
    %v860 = vpack.c.b16 %v812, %v811
    %v861 = vpack.c.b16 %v814, %v813
    %v862 = vpack.c.b16 %v816, %v815
    %v863 = vpack.c.b16 %v818, %v817
    %v864 = vpack.c.b16 %v820, %v819
    %v865 = vpack.c.b16 %v822, %v821
    %v866 = vpack.c.b16 %v824, %v823
    %v867 = vpack.c.b16 %v826, %v825
    %v868 = vpack.c.b16 %v828, %v827
    %v869 = vpack.c.b16 %v830, %v829
    %v870 = vpack.c.b16 %v832, %v831
    %v871 = vpack.c.b16 %v834, %v833
    %v872 = vpack.c.b16 %v836, %v835
    %v873 = vpack.c.b16 %v838, %v837
    %v874 = vpack.c.b16 %v840, %v839
    %v875 = vpack.c.b16 %v842, %v841
    %v876 = vpack.c.b16 %v844, %v843
    %909 = vmatprep.subr.bf16.mxu0 0
    %910 = vmatpush1.bf16.msra.mxu0 %v852
    %911 = vmatprep.subr.bf16.mxu0 0
    %912 = vmatpush1.bf16.msra.mxu0 %v851
    %913 = vmatprep.subr.bf16.mxu0 0
    %914 = vmatpush1.bf16.msra.mxu0 %v850
    %915 = vmatprep.subr.bf16.mxu0 0
    %916 = vmatpush1.bf16.msra.mxu0 %v849
    %917 = vmatprep.subr.bf16.mxu0 0
    %918 = vmatpush1.bf16.msra.mxu0 %v848
    %919 = vmatprep.subr.bf16.mxu0 0
    %920 = vmatpush1.bf16.msra.mxu0 %v847
    %921 = vmatprep.subr.bf16.mxu0 0
    %922 = vmatpush1.bf16.msra.mxu0 %v846
    %923 = vmatprep.subr.bf16.mxu0 0
    %924 = vmatpush1.bf16.msra.mxu0 %v845
    %925 = vmatprep.subr.bf16.mxu0 0
    %926 = vmatpush2.bf16.msra.mxu0 %v860
    %927 = vmatprep.subr.bf16.mxu0 0
    %928 = vmatpush2.bf16.msra.mxu0 %v859
    %929 = vmatprep.subr.bf16.mxu0 0
    %930 = vmatpush2.bf16.msra.mxu0 %v858
    %931 = vmatprep.subr.bf16.mxu0 0
    %932 = vmatpush2.bf16.msra.mxu0 %v857
    %933 = vmatprep.subr.bf16.mxu0 0
    %934 = vmatpush2.bf16.msra.mxu0 %v856
    %935 = vmatprep.subr.bf16.mxu0 0
    %936 = vmatpush2.bf16.msra.mxu0 %v855
    %937 = vmatprep.subr.bf16.mxu0 0
    %938 = vmatpush2.bf16.msra.mxu0 %v854
    %939 = vmatprep.subr.bf16.mxu0 0
    %940 = vmatpush2.bf16.msra.mxu0 %v853
    %941 = vmatprep.mubr.bf16.mxu0 %v643
    %942 = vmatmul.mubr.bf16.gmra.mxu0 %v642
    %v943 = vpop.f32.mrf.mxu0
    %v944 = vadd.f32 %v715, %v943
    %v945 = vpop.f32.mrf.mxu0
    %v946 = vpop.f32.mrf.mxu0
    %v947 = vpop.f32.mrf.mxu0
    %948 = vdwg.mxu0
    %949 = vmatprep.subr.bf16.mxu0 0
    %950 = vmatpush1.bf16.msra.mxu0 %v868
    %951 = vmatprep.subr.bf16.mxu0 0
    %952 = vmatpush1.bf16.msra.mxu0 %v867
    %953 = vmatprep.subr.bf16.mxu0 0
    %954 = vmatpush1.bf16.msra.mxu0 %v866
    %955 = vmatprep.subr.bf16.mxu0 0
    %956 = vmatpush1.bf16.msra.mxu0 %v865
    %957 = vmatprep.subr.bf16.mxu0 0
    %958 = vmatpush1.bf16.msra.mxu0 %v864
    %959 = vmatprep.subr.bf16.mxu0 0
    %960 = vmatpush1.bf16.msra.mxu0 %v863
    %961 = vmatprep.subr.bf16.mxu0 0
    %962 = vmatpush1.bf16.msra.mxu0 %v862
    %963 = vmatprep.subr.bf16.mxu0 0
    %964 = vmatpush1.bf16.msra.mxu0 %v861
    %965 = vmatprep.subr.bf16.mxu0 0
    %966 = vmatpush2.bf16.msra.mxu0 %v876
    %967 = vmatprep.subr.bf16.mxu0 0
    %968 = vmatpush2.bf16.msra.mxu0 %v875
    %969 = vmatprep.subr.bf16.mxu0 0
    %970 = vmatpush2.bf16.msra.mxu0 %v874
    %971 = vmatprep.subr.bf16.mxu0 0
    %972 = vmatpush2.bf16.msra.mxu0 %v873
    %973 = vmatprep.subr.bf16.mxu0 0
    %974 = vmatpush2.bf16.msra.mxu0 %v872
    %975 = vmatprep.subr.bf16.mxu0 0
    %976 = vmatpush2.bf16.msra.mxu0 %v871
    %977 = vmatprep.subr.bf16.mxu0 0
    %978 = vmatpush2.bf16.msra.mxu0 %v870
    %979 = vmatprep.subr.bf16.mxu0 0
    %980 = vmatpush2.bf16.msra.mxu0 %v869
    %981 = vmatprep.mubr.bf16.mxu0 %v645
    %982 = vmatmul.mubr.bf16.gmra.mxu0 %v644
    %v983 = vpop.f32.mrf.mxu0
    %v984 = vadd.f32 %v944, %v983
    %v985 = vpop.f32.mrf.mxu0
    %v986 = vpop.f32.mrf.mxu0
    %v987 = vpop.f32.mrf.mxu0
    %988 = vdwg.mxu0
    %v989 = vmax.f32 %v984, -1.0
    %v990 = vmin.f32 %v989, 1.0
    %991 = vst [vmem:[#allocation10] sm:$0xff] %v990
    // Predicated region
    $region38: #{tpu_custom_call.1} parent=1 // pred_check
      _
    $region39: #{tpu_custom_call.1} parent=1 // pred_check_branch
      %993 = sbr.rel (0) target = $region41
    $region40: #{tpu_custom_call.1} parent=1 // pred_region
      %s995 = ssub.s32 128, 128
      %996 = vsyncadd [#allocation4], %s995
      %s998 = sshll.u32 [#allocation10], 4
      %s999 = int_to_ptr.vmem [resolvable:$true] %s998
      %1001 = dma.vmem_to_hbm [thread:$0]  %s999, 128, %s5, [#allocation4]
    $region41: #{tpu_custom_call.1} parent=1 // pred_fallthru
      _
    // Predicated region
    $region42: #{tpu_custom_call.1} parent=1 // pred_check
      _
    $region43: #{tpu_custom_call.1} parent=1 // pred_check_branch
      %1003 = sbr.rel (0) target = $region45
    $region44: #{tpu_custom_call.1} parent=1 // pred_region
      %1004 = dma.done [#allocation4], 128
    $region45: #{tpu_custom_call.1} parent=1 // pred_fallthru
      _
    %1005 = vsyncpa [#allocation3], 1
    %1006 = vsyncpa [#allocation6], 1
    %1007 = vsyncpa [#allocation9], 1
    %1008 = vsyncpa [#allocation4], 1

</llo_original>
